<compile_context>
chip_gen: v6e
topology: v6e:2x2x1
jax: 0.10.0
libtpu: 0.0.40
codegen_flags: <defaults>
</compile_context>

<pallas_src>
import jax
import jax.numpy as jnp
from jax.experimental import pallas as pl
from jax.experimental.pallas import tpu as pltpu

_LANES = 512                      # lane extent of each block (multiple of 128)
_MIN_ALIGN = 8 * _LANES           # minimum batch granule: full (8, L) slab


def _linear_kernel(w_ref, b_ref, x_ref, o_ref):
    """w_ref: SMEM (out_dim, in_dim); b_ref: SMEM (out_dim,);
    x_ref: VMEM (in_dim, S, L); o_ref: VMEM (out_dim, S, L)."""
    out_dim, in_dim = w_ref.shape
    # Hoist input-row loads: each (S, L) slab is read once and reused for
    # every output row (in_dim loads instead of in_dim*out_dim).
    xs = [x_ref[k] for k in range(in_dim)]          # statically unrolled (3)
    for j in range(out_dim):                        # statically unrolled (2)
        acc = b_ref[j] + w_ref[j, 0] * xs[0]
        for k in range(1, in_dim):
            acc = acc + w_ref[j, k] * xs[k]
        o_ref[j] = acc                              # direct per-row store


def testnet_forward_tn(x_t, weight, bias, *, tile_n=262144):
    """Lane-major entry point: x_t (in_dim, N) -> (out_dim, N).

    Use this layout end-to-end when possible; it avoids the (N,3)<->(3,N)
    wrapper transposes that otherwise triple HBM traffic for this mem-bound op.
    """
    in_dim, n = x_t.shape
    out_dim = weight.shape[0]

    # --- batch padding / tiling (clamped for small N) -----------------------
    n_min = _MIN_ALIGN * pl.cdiv(n, _MIN_ALIGN)       # round up to 8*L samples
    num_tiles = pl.cdiv(n_min, tile_n)
    if n_min >= 2 * _MIN_ALIGN:
        # Keep >= 2 (and even) grid steps so v7x's two TensorCores both work.
        num_tiles = max(num_tiles, 2)
        if num_tiles % 2:
            num_tiles += 1
    step = _MIN_ALIGN * pl.cdiv(pl.cdiv(n_min, num_tiles), _MIN_ALIGN)
    n_pad = step * num_tiles
    sub = step // _LANES                              # sublane extent (mult. of 8)

    # Pad and re-block to full-(8,128) vregs; the reshape preserves memory
    # order, so it is a free layout change.
    x_p = jnp.pad(x_t, ((0, 0), (0, n_pad - n)))
    x_r = x_p.reshape(in_dim, n_pad // _LANES, _LANES)

    out_r = pl.pallas_call(
        _linear_kernel,
        out_shape=jax.ShapeDtypeStruct((out_dim, n_pad // _LANES, _LANES),
                                       jnp.float32),
        grid=(num_tiles,),
        in_specs=[
            pl.BlockSpec(memory_space=pltpu.MemorySpace.SMEM),   # weight (2,3)
            pl.BlockSpec(memory_space=pltpu.MemorySpace.SMEM),   # bias   (2,)
            pl.BlockSpec((in_dim, sub, _LANES), lambda i: (0, i, 0)),
        ],
        out_specs=pl.BlockSpec((out_dim, sub, _LANES), lambda i: (0, i, 0)),
        compiler_params=pltpu.CompilerParams(
            dimension_semantics=("parallel",),
            vmem_limit_bytes=48 * 1024 * 1024,   # <= 48 MiB: safe on v7x's 64 MiB/TC
        ),
    )(weight, bias, x_r)

    return out_r.reshape(out_dim, n_pad)[:, :n]


def testnet_forward(x, weight, bias, *, tile_n=262144):
    """PyTorch-layout entry point: x (N, 3) f32 -> (N, 2) f32."""
    # TODO(synk): if the producer/consumer can keep (3, N)/(2, N) layouts,
    # call testnet_forward_tn directly and drop both transposes below.
    return testnet_forward_tn(x.T, weight, bias, tile_n=tile_n).T


if __name__ == "__main__":
    # Deterministic parameter setup mirroring TestNet.__init__:
    #   weight.fill_(0); bias = log(probabilities); Linear(3, 2)
    probabilities = jnp.array([0.25, 0.75], dtype=jnp.float32)
    weight = jnp.zeros((2, 3), dtype=jnp.float32)
    bias = jnp.log(probabilities)                      # (2,)

    key = jax.random.PRNGKey(0)
    kx, kw, kx2 = jax.random.split(key, 3)

    # 1) The actual TestNet configuration (zero weight -> bias broadcast),
    #    small batch (exercises the small-N clamp path, single grid step).
    x = jax.random.normal(kx, (8, 3), dtype=jnp.float32)
    out = jax.block_until_ready(testnet_forward(x, weight, bias))
    ref = x @ weight.T + bias
    assert out.shape == (8, 2)
    assert jnp.allclose(out, ref, atol=1e-6), "mismatch vs reference (zero W)"

    # 2) Nonzero-weight check so the multiply path is actually validated, on a
    #    batch large enough to exercise padding + a multi-step parallel grid.
    weight_nz = jax.random.normal(kw, (2, 3), dtype=jnp.float32)
    x2 = jax.random.normal(kx2, (5000, 3), dtype=jnp.float32)
    out_nz = jax.block_until_ready(testnet_forward(x2, weight_nz, bias))
    ref_nz = x2 @ weight_nz.T + bias
    assert out_nz.shape == (5000, 2)
    assert jnp.allclose(out_nz, ref_nz, atol=1e-5), "mismatch vs reference (nonzero W)"

    # 3) Lane-major entry point (no wrapper transposes) matches too.
    out_tn = jax.block_until_ready(testnet_forward_tn(x2.T, weight_nz, bias))
    assert jnp.allclose(out_tn.T, ref_nz, atol=1e-5), "mismatch vs reference (tn layout)"

    print("KERNEL_OK")
</pallas_src>

<mosaic_0001>
module attributes {stable_mosaic.version = 11 : i64} {
  func.func @_linear_kernel(%arg0: i32, %arg1: memref<2x3xf32, #tpu.memory_space<smem>>, %arg2: memref<2xf32, #tpu.memory_space<smem>>, %arg3: memref<3x8x512xf32, #tpu.memory_space<vmem>>, %arg4: memref<2x8x512xf32, #tpu.memory_space<vmem>>) attributes {dimension_semantics = [#tpu.dimension_semantics<parallel>], iteration_bounds = array<i64: 1>, scalar_prefetch = 0 : i64, scratch_operands = 0 : i64, tpu.core_type = #tpu.core_type<tc>, window_params = [{transform_indices = @transform_0, window_bounds = array<i64: 2, 3>}, {transform_indices = @transform_1, window_bounds = array<i64: 2>}, {transform_indices = @transform_2, window_bounds = array<i64: 3, 8, 512>}, {transform_indices = @transform_3, window_bounds = array<i64: 2, 8, 512>}]} {
    %c0 = arith.constant 0 : index
    %c0_0 = arith.constant 0 : index
    %c0_1 = arith.constant 0 : index
    %0 = vector.load %arg3[%c0, %c0_0, %c0_1] : memref<3x8x512xf32, #tpu.memory_space<vmem>>, vector<1x8x512xf32>
    %1 = vector.shape_cast %0 : vector<1x8x512xf32> to vector<8x512xf32>
    %c1 = arith.constant 1 : index
    %c0_2 = arith.constant 0 : index
    %c0_3 = arith.constant 0 : index
    %2 = vector.load %arg3[%c1, %c0_2, %c0_3] : memref<3x8x512xf32, #tpu.memory_space<vmem>>, vector<1x8x512xf32>
    %3 = vector.shape_cast %2 : vector<1x8x512xf32> to vector<8x512xf32>
    %c2 = arith.constant 2 : index
    %c0_4 = arith.constant 0 : index
    %c0_5 = arith.constant 0 : index
    %4 = vector.load %arg3[%c2, %c0_4, %c0_5] : memref<3x8x512xf32, #tpu.memory_space<vmem>>, vector<1x8x512xf32>
    %5 = vector.shape_cast %4 : vector<1x8x512xf32> to vector<8x512xf32>
    %c0_6 = arith.constant 0 : index
    %6 = memref.load %arg2[%c0_6] : memref<2xf32, #tpu.memory_space<smem>>
    %c0_7 = arith.constant 0 : index
    %c0_8 = arith.constant 0 : index
    %7 = memref.load %arg1[%c0_7, %c0_8] : memref<2x3xf32, #tpu.memory_space<smem>>
    %8 = vector.broadcast %7 : f32 to vector<8x512xf32>
    %9 = arith.mulf %8, %1 : vector<8x512xf32>
    %10 = vector.broadcast %6 : f32 to vector<8x512xf32>
    %11 = arith.addf %10, %9 : vector<8x512xf32>
    %c0_9 = arith.constant 0 : index
    %c1_10 = arith.constant 1 : index
    %12 = memref.load %arg1[%c0_9, %c1_10] : memref<2x3xf32, #tpu.memory_space<smem>>
    %13 = vector.broadcast %12 : f32 to vector<8x512xf32>
    %14 = arith.mulf %13, %3 : vector<8x512xf32>
    %15 = arith.addf %11, %14 : vector<8x512xf32>
    %c0_11 = arith.constant 0 : index
    %c2_12 = arith.constant 2 : index
    %16 = memref.load %arg1[%c0_11, %c2_12] : memref<2x3xf32, #tpu.memory_space<smem>>
    %17 = vector.broadcast %16 : f32 to vector<8x512xf32>
    %18 = arith.mulf %17, %5 : vector<8x512xf32>
    %19 = arith.addf %15, %18 : vector<8x512xf32>
    %c0_13 = arith.constant 0 : index
    %c0_14 = arith.constant 0 : index
    %c0_15 = arith.constant 0 : index
    %20 = vector.load %arg4[%c0_13, %c0_14, %c0_15] : memref<2x8x512xf32, #tpu.memory_space<vmem>>, vector<1x8x512xf32>
    %21 = vector.shape_cast %20 : vector<1x8x512xf32> to vector<8x512xf32>
    %22 = vector.shape_cast %19 : vector<8x512xf32> to vector<1x8x512xf32>
    tpu.vector_store %arg4[%c0_13, %c0_14, %c0_15], %22 {strides = array<i32>} : memref<2x8x512xf32, #tpu.memory_space<vmem>>, vector<1x8x512xf32>,
    %c1_16 = arith.constant 1 : index
    %23 = memref.load %arg2[%c1_16] : memref<2xf32, #tpu.memory_space<smem>>
    %c1_17 = arith.constant 1 : index
    %c0_18 = arith.constant 0 : index
    %24 = memref.load %arg1[%c1_17, %c0_18] : memref<2x3xf32, #tpu.memory_space<smem>>
    %25 = vector.broadcast %24 : f32 to vector<8x512xf32>
    %26 = arith.mulf %25, %1 : vector<8x512xf32>
    %27 = vector.broadcast %23 : f32 to vector<8x512xf32>
    %28 = arith.addf %27, %26 : vector<8x512xf32>
    %c1_19 = arith.constant 1 : index
    %c1_20 = arith.constant 1 : index
    %29 = memref.load %arg1[%c1_19, %c1_20] : memref<2x3xf32, #tpu.memory_space<smem>>
    %30 = vector.broadcast %29 : f32 to vector<8x512xf32>
    %31 = arith.mulf %30, %3 : vector<8x512xf32>
    %32 = arith.addf %28, %31 : vector<8x512xf32>
    %c1_21 = arith.constant 1 : index
    %c2_22 = arith.constant 2 : index
    %33 = memref.load %arg1[%c1_21, %c2_22] : memref<2x3xf32, #tpu.memory_space<smem>>
    %34 = vector.broadcast %33 : f32 to vector<8x512xf32>
    %35 = arith.mulf %34, %5 : vector<8x512xf32>
    %36 = arith.addf %32, %35 : vector<8x512xf32>
    %c1_23 = arith.constant 1 : index
    %c0_24 = arith.constant 0 : index
    %c0_25 = arith.constant 0 : index
    %37 = vector.load %arg4[%c1_23, %c0_24, %c0_25] : memref<2x8x512xf32, #tpu.memory_space<vmem>>, vector<1x8x512xf32>
    %38 = vector.shape_cast %37 : vector<1x8x512xf32> to vector<8x512xf32>
    %39 = vector.shape_cast %36 : vector<8x512xf32> to vector<1x8x512xf32>
    tpu.vector_store %arg4[%c1_23, %c0_24, %c0_25], %39 {strides = array<i32>} : memref<2x8x512xf32, #tpu.memory_space<vmem>>, vector<1x8x512xf32>,
    return
  }
  func.func @transform_0(%arg0: i32) -> (i32, i32) {
    %c0_i32 = arith.constant 0 : i32
    %c0_i32_0 = arith.constant 0 : i32
    %c0_i32_1 = arith.constant 0 : i32
    return %c0_i32, %c0_i32_0 : i32, i32
  }
  func.func @transform_1(%arg0: i32) -> i32 {
    %c0_i32 = arith.constant 0 : i32
    %c0_i32_0 = arith.constant 0 : i32
    return %c0_i32 : i32
  }
  func.func @transform_2(%arg0: i32) -> (i32, i32, i32) {
    %c0_i32 = arith.constant 0 : i32
    %c0_i32_0 = arith.constant 0 : i32
    %c0_i32_1 = arith.constant 0 : i32
    return %c0_i32, %arg0, %c0_i32_0 : i32, i32, i32
  }
  func.func @transform_3(%arg0: i32) -> (i32, i32, i32) {
    %c0_i32 = arith.constant 0 : i32
    %c0_i32_0 = arith.constant 0 : i32
    %c0_i32_1 = arith.constant 0 : i32
    return %c0_i32, %arg0, %c0_i32_0 : i32, i32, i32
  }
}

</mosaic_0001>

<llo_original>
// kernel: tpu_custom_call.1
$region0: #{tpu_custom_call.1}
  #allocation0 [shape = 'u32[]', space=smem, size = 0x4, offset = 0x4, fixed_abs, tag = 'smem constant byte address 0x4 - core index']
  #allocation1 [shape = 'u32[144,128]{1,0:T(1,128)}', space=vmem, size = 0x12000, scoped, tag = 'internal scratch']
  %s0 = inlined_call_operand.hbm [shape: f32[2,3], index: 0, kind: input, shape index: {}]
  %s1 = inlined_call_operand.vmem [shape: f32[2], index: 1, kind: input, shape index: {}]
  %s2 = inlined_call_operand.hbm [shape: f32[3,8,512], index: 2, kind: input, shape index: {}]
  %s3 = inlined_call_operand.hbm [shape: f32[2,8,512], index: 3, kind: output, shape index: {}]
  %s4 = sld [smem:[#allocation0]]
  $region34: #{tpu_custom_call.1} parent=0
    _
  %s6 = ssub.s32 1, %s4
  %s7 = scalar_select 0, %s6, %s4
  $region1: #{tpu_custom_call.1} parent=0
    #allocation2 [shape = 'u8[1024]{0}', space=smem, size = 0x400, scoped, tag = 'input window, operand 0, single buffered']
    #allocation3 [shape = 's32[1]{0}', space=sflag, size = 0x4, scoped, tag = 'scoped memory for tpu_custom_call.1']
    #allocation4 [shape = 's32[1]{0}', space=sflag, size = 0x4, scoped, tag = 'scoped memory for tpu_custom_call.1']
    #allocation5 [shape = 's32[1]{0}', space=sflag, size = 0x4, scoped, tag = 'scoped memory for tpu_custom_call.1']
    #allocation6 [shape = 's32[1]{0}', space=sflag, size = 0x4, scoped, tag = 'scoped memory for tpu_custom_call.1']
    #allocation7 [shape = 'u8[512]{0}', space=smem, size = 0x200, scoped, tag = 'input window, operand 1, single buffered']
    #allocation8 [shape = 'u8[49152]{0}', space=vmem, size = 0xc000, scoped, tag = 'input window, operand 2, single buffered']
    #allocation9 [shape = 'u8[32768]{0}', space=vmem, size = 0x8000, scoped, tag = 'output window, operand 0, single buffered']
    %8 = vsyncpa [#allocation5], 0
    %9 = vsyncpa [#allocation6], 0
    %10 = vsyncpa [#allocation3], 0
    %11 = vsyncpa [#allocation4], 0
    // Predicated region
    $region2: #{tpu_custom_call.1} parent=1 // pred_check
      _
    $region3: #{tpu_custom_call.1} parent=1 // pred_check_branch
      %13 = sbr.rel (0) target = $region5
    $region4: #{tpu_custom_call.1} parent=1 // pred_region
      %s15 = ssub.s32 32, 32
      %16 = vsyncadd [#allocation5], %s15
      %19 = dma.hbm_to_smem %s0, 32, [#allocation2], [#allocation5]
    $region5: #{tpu_custom_call.1} parent=1 // pred_fallthru
      _
    // Predicated region
    $region6: #{tpu_custom_call.1} parent=1 // pred_check
      _
    $region7: #{tpu_custom_call.1} parent=1 // pred_check_branch
      %21 = sbr.rel (0) target = $region9
    $region8: #{tpu_custom_call.1} parent=1 // pred_region
      %s23 = ssub.s32 16, 16
      %24 = vsyncadd [#allocation6], %s23
      %s26 = sshll.u32 %s1, 4
      %s27 = int_to_ptr.vmem [resolvable:$true] %s26
      %29 = dma.vmem_to_smem %s27, 16, [#allocation7], [#allocation6]
    $region9: #{tpu_custom_call.1} parent=1 // pred_fallthru
      _
    // Predicated region
    $region10: #{tpu_custom_call.1} parent=1 // pred_check
      _
    $region11: #{tpu_custom_call.1} parent=1 // pred_check_branch
      %31 = sbr.rel (0) target = $region13
    $region12: #{tpu_custom_call.1} parent=1 // pred_region
      %s33 = ssub.s32 1536, 1536
      %34 = vsyncadd [#allocation3], %s33
      %s35 = sshll.u32 [#allocation8], 4
      %s36 = int_to_ptr.vmem [resolvable:$true] %s35
      %41 = dma.hbm_to_vmem [thread:$0]  %s2, 1536, %s36, [#allocation3], 512, 512, 32
    $region13: #{tpu_custom_call.1} parent=1 // pred_fallthru
      _
    // Predicated region
    $region14: #{tpu_custom_call.1} parent=1 // pred_check
      _
    $region15: #{tpu_custom_call.1} parent=1 // pred_check_branch
      %43 = sbr.rel (0) target = $region17
    $region16: #{tpu_custom_call.1} parent=1 // pred_region
      %44 = dma.done [#allocation5], 32
    $region17: #{tpu_custom_call.1} parent=1 // pred_fallthru
      _
    // Predicated region
    $region18: #{tpu_custom_call.1} parent=1 // pred_check
      _
    $region19: #{tpu_custom_call.1} parent=1 // pred_check_branch
      %46 = sbr.rel (0) target = $region21
    $region20: #{tpu_custom_call.1} parent=1 // pred_region
      %47 = dma.done [#allocation6], 16
    $region21: #{tpu_custom_call.1} parent=1 // pred_fallthru
      _
    // Predicated region
    $region22: #{tpu_custom_call.1} parent=1 // pred_check
      _
    $region23: #{tpu_custom_call.1} parent=1 // pred_check_branch
      %49 = sbr.rel (0) target = $region25
    $region24: #{tpu_custom_call.1} parent=1 // pred_region
      %50 = dma.done [#allocation3], 1536
    $region25: #{tpu_custom_call.1} parent=1 // pred_fallthru
      _
    %51 = sfence
    %v52 = vld [vmem:[#allocation8] sm:$0xff]
    %v53 = vld [vmem:[#allocation8 + $0x8] sm:$0xff]
    %v54 = vld [vmem:[#allocation8 + $0x10] sm:$0xff]
    %v55 = vld [vmem:[#allocation8 + $0x18] sm:$0xff]
    %s56 = scalar_lea.vmem [#allocation8], 32
    %v57 = vld [vmem:[%s56] sm:$0xff]
    %v58 = vld [vmem:[%s56 + $0x8] sm:$0xff]
    %v59 = vld [vmem:[%s56 + $0x10] sm:$0xff]
    %v60 = vld [vmem:[%s56 + $0x18] sm:$0xff]
    %s61 = scalar_lea.vmem [#allocation8], 64
    %v62 = vld [vmem:[%s61] sm:$0xff]
    %v63 = vld [vmem:[%s61 + $0x8] sm:$0xff]
    %v64 = vld [vmem:[%s61 + $0x10] sm:$0xff]
    %v65 = vld [vmem:[%s61 + $0x18] sm:$0xff]
    %s66 = sld [smem:[#allocation7]]
    %s67 = sld [smem:[#allocation2]]
    %v68 = vstv %s67
    %v69 = vmul.f32 %v68, %v52
    %v70 = vmul.f32 %v68, %v53
    %v71 = vmul.f32 %v68, %v54
    %v72 = vmul.f32 %v68, %v55
    %v73 = vstv %s66
    %v74 = vadd.f32 %v73, %v69
    %v75 = vadd.f32 %v73, %v70
    %v76 = vadd.f32 %v73, %v71
    %v77 = vadd.f32 %v73, %v72
    %s78 = sld [smem:[#allocation2 + $0x1]]
    %v79 = vstv %s78
    %v80 = vmul.f32 %v79, %v57
    %v81 = vmul.f32 %v79, %v58
    %v82 = vmul.f32 %v79, %v59
    %v83 = vmul.f32 %v79, %v60
    %v84 = vadd.f32 %v74, %v80
    %v85 = vadd.f32 %v75, %v81
    %v86 = vadd.f32 %v76, %v82
    %v87 = vadd.f32 %v77, %v83
    %s88 = sld [smem:[#allocation2 + $0x2]]
    %v89 = vstv %s88
    %v90 = vmul.f32 %v89, %v62
    %v91 = vmul.f32 %v89, %v63
    %v92 = vmul.f32 %v89, %v64
    %v93 = vmul.f32 %v89, %v65
    %v94 = vadd.f32 %v84, %v90
    %v95 = vadd.f32 %v85, %v91
    %v96 = vadd.f32 %v86, %v92
    %v97 = vadd.f32 %v87, %v93
    %98 = vst [vmem:[#allocation9] sm:$0xff] %v94
    %99 = vst [vmem:[#allocation9 + $0x8] sm:$0xff] %v95
    %100 = vst [vmem:[#allocation9 + $0x10] sm:$0xff] %v96
    %101 = vst [vmem:[#allocation9 + $0x18] sm:$0xff] %v97
    %s102 = sld [smem:[#allocation7 + $0x1]]
    %s103 = sld [smem:[#allocation2 + $0x80]]
    %v104 = vstv %s103
    %v105 = vmul.f32 %v104, %v52
    %v106 = vmul.f32 %v104, %v53
    %v107 = vmul.f32 %v104, %v54
    %v108 = vmul.f32 %v104, %v55
    %v109 = vstv %s102
    %v110 = vadd.f32 %v109, %v105
    %v111 = vadd.f32 %v109, %v106
    %v112 = vadd.f32 %v109, %v107
    %v113 = vadd.f32 %v109, %v108
    %s114 = sld [smem:[#allocation2 + $0x81]]
    %v115 = vstv %s114
    %v116 = vmul.f32 %v115, %v57
    %v117 = vmul.f32 %v115, %v58
    %v118 = vmul.f32 %v115, %v59
    %v119 = vmul.f32 %v115, %v60
    %v120 = vadd.f32 %v110, %v116
    %v121 = vadd.f32 %v111, %v117
    %v122 = vadd.f32 %v112, %v118
    %v123 = vadd.f32 %v113, %v119
    %s124 = sld [smem:[#allocation2 + $0x82]]
    %v125 = vstv %s124
    %v126 = vmul.f32 %v125, %v62
    %v127 = vmul.f32 %v125, %v63
    %v128 = vmul.f32 %v125, %v64
    %v129 = vmul.f32 %v125, %v65
    %v130 = vadd.f32 %v120, %v126
    %v131 = vadd.f32 %v121, %v127
    %v132 = vadd.f32 %v122, %v128
    %v133 = vadd.f32 %v123, %v129
    %s134 = scalar_lea.vmem [#allocation9], 32
    %135 = vst [vmem:[%s134] sm:$0xff] %v130
    %136 = vst [vmem:[%s134 + $0x8] sm:$0xff] %v131
    %137 = vst [vmem:[%s134 + $0x10] sm:$0xff] %v132
    %138 = vst [vmem:[%s134 + $0x18] sm:$0xff] %v133
    // Predicated region
    $region26: #{tpu_custom_call.1} parent=1 // pred_check
      _
    $region27: #{tpu_custom_call.1} parent=1 // pred_check_branch
      %140 = sbr.rel (0) target = $region29
    $region28: #{tpu_custom_call.1} parent=1 // pred_region
      %s142 = ssub.s32 1024, 1024
      %143 = vsyncadd [#allocation4], %s142
      %s144 = sshll.u32 [#allocation9], 4
      %s145 = int_to_ptr.vmem [resolvable:$true] %s144
      %150 = dma.vmem_to_hbm [thread:$0]  %s145, 1024, %s3, [#allocation4], 512, 512, 32
    $region29: #{tpu_custom_call.1} parent=1 // pred_fallthru
      _
    // Predicated region
    $region30: #{tpu_custom_call.1} parent=1 // pred_check
      _
    $region31: #{tpu_custom_call.1} parent=1 // pred_check_branch
      %152 = sbr.rel (0) target = $region33
    $region32: #{tpu_custom_call.1} parent=1 // pred_region
      %153 = dma.done [#allocation4], 1024
    $region33: #{tpu_custom_call.1} parent=1 // pred_fallthru
      _
    %154 = vsyncpa [#allocation3], 1
    %155 = vsyncpa [#allocation4], 1
    %156 = vsyncpa [#allocation5], 1
    %157 = vsyncpa [#allocation6], 1

</llo_original>
